<compile_context>
chip_gen: v5e
topology: v5e:2x2
jax: 0.10.0
libtpu: 0.0.40
codegen_flags: <defaults>
</compile_context>

<pallas_src>
import functools

import jax
import jax.numpy as jnp
from jax.experimental import pallas as pl
from jax.experimental.pallas import tpu as pltpu

DIN, HIDDEN, DOUT = 20, 256, 10
LANE = 128
DOUT_PAD = ((DOUT + LANE - 1) // LANE) * LANE   # 128: lane-dense output slab
TILE_BATCH = 512                                # batch tile for the streaming path


def mlp_kernel(x_ref, w1_ref, b1_ref, w2_ref, b2_ref, o_ref):
    # Hidden layer: MXU matmul with f32 accumulation, bias + ReLU on the VPU.
    h = jnp.dot(x_ref[...], w1_ref[...], preferred_element_type=jnp.float32)
    h = jnp.maximum(h + b1_ref[...], 0.0)          # b1 is (1, 256), broadcasts
    # Output layer into a lane-dense (·, 128) slab; columns >= DOUT are zero
    # (zero-padded weights/bias) and get sliced off in the wrapper.
    y = jnp.dot(h.astype(w2_ref.dtype), w2_ref[...],
                preferred_element_type=jnp.float32)
    o_ref[...] = (y + b2_ref[...]).astype(o_ref.dtype)


def pad_params(w1, b1, w2, b2):
    """One-time packing: pad layer-2 output dim 10 -> 128 for unmasked stores."""
    w2p = jnp.pad(w2, ((0, 0), (0, DOUT_PAD - DOUT)))
    b2p = jnp.pad(b2.reshape(1, -1), ((0, 0), (0, DOUT_PAD - DOUT)))
    return w1, b1.reshape(1, -1), w2p, b2p


@functools.partial(jax.jit, static_argnames=("tile_batch",))
def mlp_forward(x, w1, b1, w2p, b2p, *, tile_batch=TILE_BATCH):
    B = x.shape[0]
    cost = pl.CostEstimate(
        flops=2 * B * (DIN * HIDDEN + HIDDEN * DOUT_PAD),
        transcendentals=0,
        bytes_accessed=4 * (B * (DIN + DOUT_PAD)
                            + DIN * HIDDEN + HIDDEN
                            + HIDDEN * DOUT_PAD + DOUT_PAD),
    )

    if B <= tile_batch:
        # Small batch: single invocation, no grid loop, everything in VMEM.
        out = pl.pallas_call(
            mlp_kernel,
            out_shape=jax.ShapeDtypeStruct((B, DOUT_PAD), x.dtype),
            in_specs=[pl.BlockSpec(memory_space=pltpu.MemorySpace.VMEM)] * 5,
            out_specs=pl.BlockSpec(memory_space=pltpu.MemorySpace.VMEM),
            cost_estimate=cost,
        )(x, w1, b1, w2p, b2p)
        return out[:, :DOUT]

    # Large batch: tile only the batch dim. x / y tiles stream through the
    # auto-pipeline; weights & biases use constant index_maps so they stay
    # VMEM-resident across all grid steps. Batch axis is "parallel" so the
    # two TensorCores on v7x split it. Per-buffer footprint at TILE_BATCH=512
    # (x 40 KB, hidden 512 KB, out 256 KB, weights ~160 KB) fits comfortably
    # under v7x's 32 MiB scoped-VMEM default.
    nb = pl.cdiv(B, tile_batch)
    b_pad = nb * tile_batch
    xp = jnp.pad(x, ((0, b_pad - B), (0, 0))) if b_pad != B else x
    out = pl.pallas_call(
        mlp_kernel,
        out_shape=jax.ShapeDtypeStruct((b_pad, DOUT_PAD), x.dtype),
        grid=(nb,),
        in_specs=[
            pl.BlockSpec((tile_batch, DIN), lambda i: (i, 0)),
            pl.BlockSpec((DIN, HIDDEN), lambda i: (0, 0)),
            pl.BlockSpec((1, HIDDEN), lambda i: (0, 0)),
            pl.BlockSpec((HIDDEN, DOUT_PAD), lambda i: (0, 0)),
            pl.BlockSpec((1, DOUT_PAD), lambda i: (0, 0)),
        ],
        out_specs=pl.BlockSpec((tile_batch, DOUT_PAD), lambda i: (i, 0)),
        compiler_params=pltpu.CompilerParams(
            dimension_semantics=("parallel",)),
        cost_estimate=cost,
    )(xp, w1, b1, w2p, b2p)
    return out[:B, :DOUT]


def init_params(key):
    # Deterministic init mimicking PyTorch Linear default (uniform +-1/sqrt(fan_in)).
    k1, k2, k3, k4 = jax.random.split(key, 4)
    lim1 = 1.0 / jnp.sqrt(DIN)
    lim2 = 1.0 / jnp.sqrt(HIDDEN)
    w1 = jax.random.uniform(k1, (DIN, HIDDEN), jnp.float32, -lim1, lim1)
    b1 = jax.random.uniform(k2, (1, HIDDEN), jnp.float32, -lim1, lim1)
    w2 = jax.random.uniform(k3, (HIDDEN, DOUT), jnp.float32, -lim2, lim2)
    b2 = jax.random.uniform(k4, (1, DOUT), jnp.float32, -lim2, lim2)
    return w1, b1, w2, b2


if __name__ == "__main__":
    key = jax.random.PRNGKey(0)
    kx, kp = jax.random.split(key)

    # Matches `torch.rand(2, 20)`: batch=2, in_features=20, uniform [0, 1).
    x = jax.random.uniform(kx, (2, DIN), jnp.float32)
    w1, b1, w2, b2 = init_params(kp)
    w1p, b1p, w2p, b2p = pad_params(w1, b1, w2, b2)

    out = jax.block_until_ready(mlp_forward(x, w1p, b1p, w2p, b2p))
    ref = jnp.maximum(x @ w1 + b1, 0.0) @ w2 + b2
    assert out.shape == (2, DOUT)
    assert jnp.allclose(out, ref, atol=1e-5, rtol=1e-5)

    # Also exercise the batch-tiled, weights-resident "parallel"-grid path
    # (includes a ragged batch so the padding/slicing logic is covered).
    xb = jax.random.uniform(jax.random.PRNGKey(1), (1032, DIN), jnp.float32)
    outb = jax.block_until_ready(mlp_forward(xb, w1p, b1p, w2p, b2p))
    refb = jnp.maximum(xb @ w1 + b1, 0.0) @ w2 + b2
    assert outb.shape == (1032, DOUT)
    assert jnp.allclose(outb, refb, atol=1e-4, rtol=1e-4)

    print("KERNEL_OK")
</pallas_src>

<mosaic_0001>
module attributes {stable_mosaic.version = 11 : i64} {
  func.func @mlp_kernel(%arg0: memref<2x20xf32, #tpu.memory_space<vmem>>, %arg1: memref<20x256xf32, #tpu.memory_space<vmem>>, %arg2: memref<1x256xf32, #tpu.memory_space<vmem>>, %arg3: memref<256x128xf32, #tpu.memory_space<vmem>>, %arg4: memref<1x128xf32, #tpu.memory_space<vmem>>, %arg5: memref<2x128xf32, #tpu.memory_space<vmem>>) attributes {dimension_semantics = [], scalar_prefetch = 0 : i64, scratch_operands = 0 : i64, tpu.core_type = #tpu.core_type<tc>} {
    %c0 = arith.constant 0 : index
    %c0_0 = arith.constant 0 : index
    %0 = vector.load %arg0[%c0, %c0_0] : memref<2x20xf32, #tpu.memory_space<vmem>>, vector<2x20xf32>
    %c0_1 = arith.constant 0 : index
    %c0_2 = arith.constant 0 : index
    %1 = vector.load %arg1[%c0_1, %c0_2] : memref<20x256xf32, #tpu.memory_space<vmem>>, vector<20x256xf32>
    %cst = arith.constant dense<0.000000e+00> : vector<2x256xf32>
    %2 = tpu.matmul %0, %1, %cst {dimension_numbers = #tpu.dot_dimension_numbers<[1], [0], [0], [1], [0, 0, 1, 1], [], []>} : vector<2x20xf32>, vector<20x256xf32>, vector<2x256xf32> -> vector<2x256xf32>
    %c0_3 = arith.constant 0 : index
    %c0_4 = arith.constant 0 : index
    %3 = vector.load %arg2[%c0_3, %c0_4] : memref<1x256xf32, #tpu.memory_space<vmem>>, vector<1x256xf32>
    %4 = vector.broadcast %3 : vector<1x256xf32> to vector<2x256xf32>
    %5 = arith.addf %2, %4 : vector<2x256xf32>
    %cst_5 = arith.constant 0.000000e+00 : f32
    %6 = vector.broadcast %cst_5 : f32 to vector<2x256xf32>
    %7 = arith.maximumf %5, %6 : vector<2x256xf32>
    %c0_6 = arith.constant 0 : index
    %c0_7 = arith.constant 0 : index
    %8 = vector.load %arg3[%c0_6, %c0_7] : memref<256x128xf32, #tpu.memory_space<vmem>>, vector<256x128xf32>
    %cst_8 = arith.constant dense<0.000000e+00> : vector<2x128xf32>
    %9 = tpu.matmul %7, %8, %cst_8 {dimension_numbers = #tpu.dot_dimension_numbers<[1], [0], [0], [1], [0, 0, 1, 1], [], []>} : vector<2x256xf32>, vector<256x128xf32>, vector<2x128xf32> -> vector<2x128xf32>
    %c0_9 = arith.constant 0 : index
    %c0_10 = arith.constant 0 : index
    %10 = vector.load %arg4[%c0_9, %c0_10] : memref<1x128xf32, #tpu.memory_space<vmem>>, vector<1x128xf32>
    %11 = vector.broadcast %10 : vector<1x128xf32> to vector<2x128xf32>
    %12 = arith.addf %9, %11 : vector<2x128xf32>
    %c0_11 = arith.constant 0 : index
    %c0_12 = arith.constant 0 : index
    %13 = vector.load %arg5[%c0_11, %c0_12] : memref<2x128xf32, #tpu.memory_space<vmem>>, vector<2x128xf32>
    tpu.vector_store %arg5[%c0_11, %c0_12], %12 {strides = array<i32>} : memref<2x128xf32, #tpu.memory_space<vmem>>, vector<2x128xf32>,
    return
  }
}

</mosaic_0001>

<llo_original>
// kernel: mlp_forward.1
$region0: #{mlp_forward.1}
  #allocation0 [shape = 'u32[]', space=smem, size = 0x4, offset = 0x4, fixed_abs, tag = 'smem constant byte address 0x4 - core index']
  #allocation1 [shape = 'u32[72,128]{1,0:T(1,128)}', space=vmem, size = 0x9000, scoped, tag = 'internal scratch']
  %s0 = inlined_call_operand.hbm [shape: f32[2,20], index: 0, kind: input, shape index: {}]
  %s1 = inlined_call_operand.hbm [shape: f32[20,256], index: 1, kind: input, shape index: {}]
  %s2 = inlined_call_operand.hbm [shape: f32[1,256], index: 2, kind: input, shape index: {}]
  %s3 = inlined_call_operand.hbm [shape: f32[256,128], index: 3, kind: input, shape index: {}]
  %s4 = inlined_call_operand.vmem [shape: f32[1,128], index: 4, kind: input, shape index: {}]
  %s5 = inlined_call_operand.hbm [shape: f32[2,128], index: 5, kind: output, shape index: {}]
  %s6 = sld [smem:[#allocation0]]
  $region46: #{mlp_forward.1} parent=0
    _
  %s8 = ssub.s32 1, %s6
  %s9 = scalar_select 0, %s8, %s6
  $region1: #{mlp_forward.1} parent=0
    #allocation2 [shape = 'u8[1024]{0}', space=vmem, size = 0x400, scoped, tag = 'input window, operand 0, single buffered']
    #allocation3 [shape = 's32[1]{0}', space=sflag, size = 0x4, scoped, tag = 'scoped memory for mlp_forward.1']
    #allocation4 [shape = 's32[1]{0}', space=sflag, size = 0x4, scoped, tag = 'scoped memory for mlp_forward.1']
    #allocation5 [shape = 'u8[24576]{0}', space=vmem, size = 0x6000, scoped, tag = 'input window, operand 1, single buffered']
    #allocation6 [shape = 's32[1]{0}', space=sflag, size = 0x4, scoped, tag = 'scoped memory for mlp_forward.1']
    #allocation7 [shape = 'u8[1024]{0}', space=vmem, size = 0x400, scoped, tag = 'input window, operand 2, single buffered']
    #allocation8 [shape = 'u8[131072]{0}', space=vmem, size = 0x20000, scoped, tag = 'input window, operand 3, single buffered']
    #allocation9 [shape = 's32[1]{0}', space=sflag, size = 0x4, scoped, tag = 'scoped memory for mlp_forward.1']
    #allocation10 [shape = 'u8[1024]{0}', space=vmem, size = 0x400, scoped, tag = 'output window, operand 0, single buffered']
    %10 = vsyncpa [#allocation3], 0
    %11 = vsyncpa [#allocation6], 0
    %12 = vsyncpa [#allocation9], 0
    %13 = vsyncpa [#allocation4], 0
    // Predicated region
    $region2: #{mlp_forward.1} parent=1 // pred_check
      _
    $region3: #{mlp_forward.1} parent=1 // pred_check_branch
      %15 = sbr.rel (0) target = $region5
    $region4: #{mlp_forward.1} parent=1 // pred_region
      %17 = vsyncadd [#allocation3], 0
      %s19 = sshll.u32 %s0, 4
      %s20 = int_to_ptr.hbm [resolvable:$true] %s19
      %s21 = sshll.u32 [#allocation2], 4
      %s22 = int_to_ptr.vmem [resolvable:$true] %s21
      %24 = dma.hbm_to_vmem [thread:$0]  %s20, 32, %s22, [#allocation3]
    $region5: #{mlp_forward.1} parent=1 // pred_fallthru
      _
    // Predicated region
    $region6: #{mlp_forward.1} parent=1 // pred_check
      _
    $region7: #{mlp_forward.1} parent=1 // pred_check_branch
      %26 = sbr.rel (0) target = $region9
    $region8: #{mlp_forward.1} parent=1 // pred_region
      %28 = vsyncadd [#allocation6], 0
      %s29 = sshll.u32 %s1, 4
      %s30 = int_to_ptr.hbm [resolvable:$true] %s29
      %s31 = sshll.u32 [#allocation5], 4
      %s32 = int_to_ptr.vmem [resolvable:$true] %s31
      %37 = dma.hbm_to_vmem [thread:$0]  %s30, 768, %s32, [#allocation6], 256, 256, 16
    $region9: #{mlp_forward.1} parent=1 // pred_fallthru
      _
    // Predicated region
    $region10: #{mlp_forward.1} parent=1 // pred_check
      _
    $region11: #{mlp_forward.1} parent=1 // pred_check_branch
      %39 = sbr.rel (0) target = $region13
    $region12: #{mlp_forward.1} parent=1 // pred_region
      %41 = vsyncadd [#allocation6], 0
      %s43 = sshll.u32 %s2, 4
      %s44 = int_to_ptr.hbm [resolvable:$true] %s43
      %s45 = sshll.u32 [#allocation7], 4
      %s46 = int_to_ptr.vmem [resolvable:$true] %s45
      %48 = dma.hbm_to_vmem [thread:$0]  %s44, 32, %s46, [#allocation6]
    $region13: #{mlp_forward.1} parent=1 // pred_fallthru
      _
    // Predicated region
    $region14: #{mlp_forward.1} parent=1 // pred_check
      _
    $region15: #{mlp_forward.1} parent=1 // pred_check_branch
      %50 = sbr.rel (0) target = $region17
    $region16: #{mlp_forward.1} parent=1 // pred_region
      %52 = vsyncadd [#allocation9], 0
      %s53 = sshll.u32 %s3, 4
      %s54 = int_to_ptr.hbm [resolvable:$true] %s53
      %s55 = sshll.u32 [#allocation8], 4
      %s56 = int_to_ptr.vmem [resolvable:$true] %s55
      %61 = dma.hbm_to_vmem [thread:$0]  %s54, 4096, %s56, [#allocation9], 128, 128, 8
    $region17: #{mlp_forward.1} parent=1 // pred_fallthru
      _
    // Predicated region
    $region18: #{mlp_forward.1} parent=1 // pred_check
      _
    $region19: #{mlp_forward.1} parent=1 // pred_check_branch
      %63 = sbr.rel (0) target = $region21
    $region20: #{mlp_forward.1} parent=1 // pred_region
      _
    $region21: #{mlp_forward.1} parent=1 // pred_fallthru
      _
    // Predicated region
    $region22: #{mlp_forward.1} parent=1 // pred_check
      _
    $region23: #{mlp_forward.1} parent=1 // pred_check_branch
      %65 = sbr.rel (0) target = $region25
    $region24: #{mlp_forward.1} parent=1 // pred_region
      %67 = dma.done [#allocation3], 32
    $region25: #{mlp_forward.1} parent=1 // pred_fallthru
      _
    // Predicated region
    $region26: #{mlp_forward.1} parent=1 // pred_check
      _
    $region27: #{mlp_forward.1} parent=1 // pred_check_branch
      %69 = sbr.rel (0) target = $region29
    $region28: #{mlp_forward.1} parent=1 // pred_region
      %71 = dma.done [#allocation6], 768
    $region29: #{mlp_forward.1} parent=1 // pred_fallthru
      _
    // Predicated region
    $region30: #{mlp_forward.1} parent=1 // pred_check
      _
    $region31: #{mlp_forward.1} parent=1 // pred_check_branch
      %73 = sbr.rel (0) target = $region33
    $region32: #{mlp_forward.1} parent=1 // pred_region
      %75 = dma.done [#allocation6], 32
    $region33: #{mlp_forward.1} parent=1 // pred_fallthru
      _
    // Predicated region
    $region34: #{mlp_forward.1} parent=1 // pred_check
      _
    $region35: #{mlp_forward.1} parent=1 // pred_check_branch
      %77 = sbr.rel (0) target = $region37
    $region36: #{mlp_forward.1} parent=1 // pred_region
      %79 = dma.done [#allocation9], 4096
    $region37: #{mlp_forward.1} parent=1 // pred_fallthru
      _
    %v80 = vld [vmem:[#allocation2] sm:$0x3]
    %v81 = vld [vmem:[#allocation5] sm:$0xff]
    %v82 = vld [vmem:[#allocation5 + $0x8] sm:$0xff]
    %v83 = vld [vmem:[#allocation5 + $0x10] sm:$0xff]
    %v84 = vld [vmem:[#allocation5 + $0x18] sm:$0xff]
    %v85 = vld [vmem:[#allocation5 + $0x20] sm:$0xf]
    %v86 = vld [vmem:[#allocation5 + $0x28] sm:$0xf]
    %v87 = vld [vmem:[#allocation7] sm:$0x3]
    %v89 = vperm.slane %v87, 0
    %v90 = vperm.slane %v87, 1
    %vm93 = vcmask 162816
    %v95 = vsel %vm93, %v80, 0
    %vm97 = vcmask 1043456
    %v99 = vsel %vm97, %v85, 0
    %v102 = vsel %vm97, %v86, 0
    %104 = vmatpush.msra.mxu0 0.0
    %105 = vmatpush.msra.mxu0 0.0
    %106 = vmatpush.msra.mxu0 0.0
    %107 = vmatpush.msra.mxu0 0.0
    %108 = vmatpush.msra.mxu0 0.0
    %109 = vmatpush.msra.mxu0 0.0
    %110 = vmatpush.msra.mxu0 0.0
    %111 = vmatpush.msra.mxu0 0.0
    %112 = vmatpush.msra.mxu0 0.0
    %113 = vmatpush.msra.mxu0 0.0
    %114 = vmatpush.msra.mxu0 0.0
    %115 = vmatpush.msra.mxu0 0.0
    %116 = vmatpush.msra.mxu0 0.0
    %117 = vmatpush.msra.mxu0 %v99
    %118 = vmatpush.msra.mxu0 %v83
    %119 = vmatpush.msra.mxu0 %v81
    %120 = vmatmul.f32.gmra.mxu0 %v95
    %v121 = vpop.f32.mrf.mxu0
    %v122 = vadd.f32 %v89, %v121
    %123 = vdwg.mxu0
    %124 = vmatpush.msra.mxu0 0.0
    %125 = vmatpush.msra.mxu0 0.0
    %126 = vmatpush.msra.mxu0 0.0
    %127 = vmatpush.msra.mxu0 0.0
    %128 = vmatpush.msra.mxu0 0.0
    %129 = vmatpush.msra.mxu0 0.0
    %130 = vmatpush.msra.mxu0 0.0
    %131 = vmatpush.msra.mxu0 0.0
    %132 = vmatpush.msra.mxu0 0.0
    %133 = vmatpush.msra.mxu0 0.0
    %134 = vmatpush.msra.mxu0 0.0
    %135 = vmatpush.msra.mxu0 0.0
    %136 = vmatpush.msra.mxu0 0.0
    %137 = vmatpush.msra.mxu0 %v102
    %138 = vmatpush.msra.mxu0 %v84
    %139 = vmatpush.msra.mxu0 %v82
    %140 = vmatmul.f32.gmra.mxu0 %v95
    %v141 = vpop.f32.mrf.mxu0
    %v142 = vadd.f32 %v90, %v141
    %143 = vdwg.mxu0
    %v144 = vmax.f32 %v122, 0.0
    %v145 = vmax.f32 %v142, 0.0
    %v146 = vld [vmem:[#allocation8] sm:$0xff]
    %v147 = vld [vmem:[#allocation8 + $0x8] sm:$0xff]
    %v148 = vld [vmem:[#allocation8 + $0x10] sm:$0xff]
    %v149 = vld [vmem:[#allocation8 + $0x18] sm:$0xff]
    %v150 = vld [vmem:[#allocation8 + $0x20] sm:$0xff]
    %v151 = vld [vmem:[#allocation8 + $0x28] sm:$0xff]
    %v152 = vld [vmem:[#allocation8 + $0x30] sm:$0xff]
    %v153 = vld [vmem:[#allocation8 + $0x38] sm:$0xff]
    %v154 = vld [vmem:[#allocation8 + $0x40] sm:$0xff]
    %v155 = vld [vmem:[#allocation8 + $0x48] sm:$0xff]
    %v156 = vld [vmem:[#allocation8 + $0x50] sm:$0xff]
    %v157 = vld [vmem:[#allocation8 + $0x58] sm:$0xff]
    %v158 = vld [vmem:[#allocation8 + $0x60] sm:$0xff]
    %v159 = vld [vmem:[#allocation8 + $0x68] sm:$0xff]
    %v160 = vld [vmem:[#allocation8 + $0x70] sm:$0xff]
    %v161 = vld [vmem:[#allocation8 + $0x78] sm:$0xff]
    %v162 = vld [vmem:[#allocation8 + $0x80] sm:$0xff]
    %v163 = vld [vmem:[#allocation8 + $0x88] sm:$0xff]
    %v164 = vld [vmem:[#allocation8 + $0x90] sm:$0xff]
    %v165 = vld [vmem:[#allocation8 + $0x98] sm:$0xff]
    %v166 = vld [vmem:[#allocation8 + $0xa0] sm:$0xff]
    %v167 = vld [vmem:[#allocation8 + $0xa8] sm:$0xff]
    %v168 = vld [vmem:[#allocation8 + $0xb0] sm:$0xff]
    %v169 = vld [vmem:[#allocation8 + $0xb8] sm:$0xff]
    %v170 = vld [vmem:[#allocation8 + $0xc0] sm:$0xff]
    %v171 = vld [vmem:[#allocation8 + $0xc8] sm:$0xff]
    %v172 = vld [vmem:[#allocation8 + $0xd0] sm:$0xff]
    %v173 = vld [vmem:[#allocation8 + $0xd8] sm:$0xff]
    %v174 = vld [vmem:[#allocation8 + $0xe0] sm:$0xff]
    %v175 = vld [vmem:[#allocation8 + $0xe8] sm:$0xff]
    %v176 = vld [vmem:[#allocation8 + $0xf0] sm:$0xff]
    %v177 = vld [vmem:[#allocation8 + $0xf8] sm:$0xff]
    %v178 = vld [vmem:[%s4] sm:$0x1]
    %v180 = vperm.slane %v178, 0
    %182 = vmatpush.msra.mxu0 %v161
    %183 = vmatpush.msra.mxu0 %v160
    %184 = vmatpush.msra.mxu0 %v159
    %185 = vmatpush.msra.mxu0 %v158
    %186 = vmatpush.msra.mxu0 %v157
    %187 = vmatpush.msra.mxu0 %v156
    %188 = vmatpush.msra.mxu0 %v155
    %189 = vmatpush.msra.mxu0 %v154
    %190 = vmatpush.msra.mxu0 %v153
    %191 = vmatpush.msra.mxu0 %v152
    %192 = vmatpush.msra.mxu0 %v151
    %193 = vmatpush.msra.mxu0 %v150
    %194 = vmatpush.msra.mxu0 %v149
    %195 = vmatpush.msra.mxu0 %v148
    %196 = vmatpush.msra.mxu0 %v147
    %197 = vmatpush.msra.mxu0 %v146
    %198 = vmatmul.f32.gmra.mxu0 %v144
    %v199 = vpop.f32.mrf.mxu0
    %v200 = vadd.f32 %v180, %v199
    %201 = vdwg.mxu0
    %202 = vmatpush.msra.mxu0 %v177
    %203 = vmatpush.msra.mxu0 %v176
    %204 = vmatpush.msra.mxu0 %v175
    %205 = vmatpush.msra.mxu0 %v174
    %206 = vmatpush.msra.mxu0 %v173
    %207 = vmatpush.msra.mxu0 %v172
    %208 = vmatpush.msra.mxu0 %v171
    %209 = vmatpush.msra.mxu0 %v170
    %210 = vmatpush.msra.mxu0 %v169
    %211 = vmatpush.msra.mxu0 %v168
    %212 = vmatpush.msra.mxu0 %v167
    %213 = vmatpush.msra.mxu0 %v166
    %214 = vmatpush.msra.mxu0 %v165
    %215 = vmatpush.msra.mxu0 %v164
    %216 = vmatpush.msra.mxu0 %v163
    %217 = vmatpush.msra.mxu0 %v162
    %218 = vmatmul.f32.gmra.mxu0 %v145
    %v219 = vpop.f32.mrf.mxu0
    %v220 = vadd.f32 %v200, %v219
    %221 = vdwg.mxu0
    %222 = vst [vmem:[#allocation10] sm:$0x3] %v220
    // Predicated region
    $region38: #{mlp_forward.1} parent=1 // pred_check
      _
    $region39: #{mlp_forward.1} parent=1 // pred_check_branch
      %224 = sbr.rel (0) target = $region41
    $region40: #{mlp_forward.1} parent=1 // pred_region
      %226 = vsyncadd [#allocation4], 0
      %s228 = sshll.u32 [#allocation10], 4
      %s229 = int_to_ptr.vmem [resolvable:$true] %s228
      %s230 = sshll.u32 %s5, 4
      %s231 = int_to_ptr.hbm [resolvable:$true] %s230
      %233 = dma.vmem_to_hbm [thread:$0]  %s229, 32, %s231, [#allocation4]
    $region41: #{mlp_forward.1} parent=1 // pred_fallthru
      _
    // Predicated region
    $region42: #{mlp_forward.1} parent=1 // pred_check
      _
    $region43: #{mlp_forward.1} parent=1 // pred_check_branch
      %235 = sbr.rel (0) target = $region45
    $region44: #{mlp_forward.1} parent=1 // pred_region
      %237 = dma.done [#allocation4], 32
    $region45: #{mlp_forward.1} parent=1 // pred_fallthru
      _
    %238 = vsyncpa [#allocation3], 1
    %239 = vsyncpa [#allocation6], 1
    %240 = vsyncpa [#allocation9], 1
    %241 = vsyncpa [#allocation4], 1

</llo_original>
